<compile_context>
chip_gen: v7x
topology: tpu7x:2x2x1
jax: 0.10.0
libtpu: 0.0.40
codegen_flags: <defaults>
</compile_context>

<pallas_src>
import math
from typing import NamedTuple

import numpy as np
import jax
import jax.numpy as jnp
from jax import lax
from jax.experimental import pallas as pl
from jax.experimental.pallas import tpu as pltpu


def _round_up(x, m):
    return (x + m - 1) // m * m


def _gelu_exact(x):
    # PyTorch nn.GELU() default = exact erf form.
    return 0.5 * x * (1.0 + lax.erf(x * (1.0 / math.sqrt(2.0))))


class PackedFlowParams(NamedTuple):
    params: jax.Array     # [n_linear * stride, feat] f32, lane-dense, zero padded
    n_linear: int
    feat: int             # common lane width (multiple of 128)
    stride: int            # rows per linear block (feat weight rows + bias row + pad)
    d_in: int
    d_in_k: int            # d_in rounded up to a multiple of 8 (first-layer K extent)
    out_dim: int


def pack_flow_params(weights, biases):
    """Pack all Linear weights/biases into one lane-dense f32 buffer (done ONCE at init).

    Layout per linear i (rows i*stride ...):
      rows [0, feat)  : weight, zero-padded to [feat, feat]
      row  feat       : bias, zero-padded to [feat]
      rows feat+1..+7 : zero padding (keeps every block 8-sublane aligned)
    """
    n_linear = len(weights)
    d_in = weights[0].shape[0]
    out_dim = weights[-1].shape[1]
    dims = [w.shape[0] for w in weights] + [w.shape[1] for w in weights]
    feat = _round_up(max(dims), 128)
    stride = feat + 8
    d_in_k = _round_up(d_in, 8)

    p = np.zeros((n_linear * stride, feat), np.float32)     # host-side, no device scatters
    for i, (w, b) in enumerate(zip(weights, biases)):
        fin, fout = w.shape
        base = i * stride
        p[base:base + fin, :fout] = np.asarray(w, np.float32)
        p[base + feat, :fout] = np.asarray(b, np.float32).reshape(-1)
    return PackedFlowParams(jnp.asarray(p), n_linear, feat, stride, d_in, d_in_k, out_dim)


def _make_kernel(n_linear, feat, stride, d_in_k, out_dim, compute_dtype):
    """Kernel over one batch tile. All param slices are static (zero-cost ref views)."""

    def kernel(z_ref, p_ref, o_ref):
        x = z_ref[...].astype(jnp.float32)                   # [bt, d_in_k]
        for i in range(n_linear):
            if i > 0:                                        # GELU precedes every Linear but the first
                x = _gelu_exact(x)                           # gelu(0)=0 -> padded lanes stay 0
            base = i * stride                                # static, 8-aligned
            k = d_in_k if i == 0 else feat                   # real K for layer 0, padded K otherwise
            w = p_ref[base:base + k, :].astype(compute_dtype)          # [k, feat]
            b = p_ref[base + feat:base + feat + 1, :]                  # [1, feat] f32
            x = jnp.dot(x.astype(compute_dtype), w,
                        preferred_element_type=jnp.float32) + b        # f32 accumulate + f32 bias
        o_ref[...] = x[:, :out_dim]                          # only real output lanes hit HBM

    return kernel


def flow_model_forward(z, packed: PackedFlowParams, *, block_rows=2048,
                       compute_dtype=jnp.bfloat16):
    """FlowModel forward. z: [B, d_in] -> [B, out_dim]."""
    params, n_linear, feat, stride, d_in, d_in_k, out_dim = packed
    B, zd = z.shape
    assert zd == d_in, (zd, d_in)

    bt = _round_up(min(block_rows, _round_up(B, 8)), 8)      # row tile, multiple of 8
    b_pad = _round_up(B, bt)

    z_p = z.astype(jnp.float32)
    if b_pad != B or d_in_k != d_in:
        z_p = jnp.pad(z_p, ((0, b_pad - B), (0, d_in_k - d_in)))  # rows to tile, lanes to 8-mult

    out = pl.pallas_call(
        _make_kernel(n_linear, feat, stride, d_in_k, out_dim, compute_dtype),
        out_shape=jax.ShapeDtypeStruct((b_pad, out_dim), jnp.float32),
        grid=(b_pad // bt,),
        in_specs=[
            pl.BlockSpec((bt, d_in_k), lambda i: (i, 0)),     # z tile at its natural lane width
            pl.BlockSpec(params.shape, lambda i: (0, 0)),     # whole param pack, VMEM-resident
        ],
        out_specs=pl.BlockSpec((bt, out_dim), lambda i: (i, 0)),  # 4 B/row writeback, not 512
        compiler_params=pltpu.CompilerParams(
            dimension_semantics=("parallel",)),               # megacore-shardable on v7x
    )(z_p, params)

    return out[:B]


def init_params(key, conditioning_dim, hidden_dim, layers, out_dim):
    """nn.Linear-style uniform init (NONZERO everywhere so the full path is verified)."""
    dims = [(conditioning_dim, hidden_dim)] \
         + [(hidden_dim, hidden_dim)] * (layers - 1) \
         + [(hidden_dim, out_dim)]
    keys = jax.random.split(key, 2 * len(dims))
    weights, biases = [], []
    for i, (fin, fout) in enumerate(dims):
        bound = 1.0 / math.sqrt(fin)
        w = jax.random.uniform(keys[2 * i], (fin, fout), jnp.float32, -bound, bound)
        b = jax.random.uniform(keys[2 * i + 1], (fout,), jnp.float32, -bound, bound)
        weights.append(w)
        biases.append(b)
    return weights, biases


def reference_forward(z, weights, biases, matmul_dtype=jnp.float32):
    """Pure-JAX reference mirroring the PyTorch module (optionally with bf16 matmuls)."""
    x = z.astype(jnp.float32)
    for i, (w, b) in enumerate(zip(weights, biases)):
        if i > 0:
            x = _gelu_exact(x)
        x = jnp.dot(x.astype(matmul_dtype), w.astype(matmul_dtype),
                    preferred_element_type=jnp.float32) + b.astype(jnp.float32)[None, :]
    return x


if __name__ == "__main__":
    conditioning_dim = 32
    hidden_dim = 64
    layers = 4
    out_dim = 1
    B = 100                                 # not a multiple of 8/tile -> exercises row padding

    key = jax.random.PRNGKey(0)
    k_params, k_z = jax.random.split(key)
    weights, biases = init_params(k_params, conditioning_dim, hidden_dim, layers, out_dim)
    z = jax.random.normal(k_z, (B, conditioning_dim), dtype=jnp.float32)

    packed = pack_flow_params(weights, biases)   # hoisted: built once, reused across calls

    # Small row tile so the 1-D batch grid actually runs multiple steps in the test.
    out = flow_model_forward(z, packed, block_rows=32, compute_dtype=jnp.bfloat16)
    out = jax.block_until_ready(out)
    assert out.shape == (B, out_dim), out.shape

    # Tight check vs. a reference using the same bf16-matmul/f32-accumulate numerics.
    ref_bf16 = reference_forward(z, weights, biases, matmul_dtype=jnp.bfloat16)
    err_bf16 = float(jnp.max(jnp.abs(out - ref_bf16)))
    assert jnp.allclose(out, ref_bf16, atol=2e-3, rtol=2e-3), (err_bf16, out[:4], ref_bf16[:4])

    # Loose sanity check vs. full-f32 reference (bf16 MXU quantization bound).
    ref_f32 = reference_forward(z, weights, biases, matmul_dtype=jnp.float32)
    err_f32 = float(jnp.max(jnp.abs(out - ref_f32)))
    assert jnp.allclose(out, ref_f32, atol=5e-2, rtol=5e-2), (err_f32, out[:4], ref_f32[:4])

    print("KERNEL_OK")
</pallas_src>

<mosaic_0001>
module attributes {stable_mosaic.version = 11 : i64} {
  func.func @kernel(%arg0: i32, %arg1: memref<32x32xf32, #tpu.memory_space<vmem>>, %arg2: memref<680x128xf32, #tpu.memory_space<vmem>>, %arg3: memref<32x1xf32, #tpu.memory_space<vmem>>) attributes {dimension_semantics = [#tpu.dimension_semantics<parallel>], iteration_bounds = array<i64: 4>, scalar_prefetch = 0 : i64, scratch_operands = 0 : i64, tpu.core_type = #tpu.core_type<tc>, window_params = [{transform_indices = @transform_0, window_bounds = array<i64: 32, 32>}, {pipeline_mode = #tpu.pipeline_mode<synchronous>, transform_indices = @transform_1, window_bounds = array<i64: 680, 128>}, {transform_indices = @transform_2, window_bounds = array<i64: 32, 1>}]} {
    %c0 = arith.constant 0 : index
    %c0_0 = arith.constant 0 : index
    %0 = vector.load %arg1[%c0, %c0_0] : memref<32x32xf32, #tpu.memory_space<vmem>>, vector<32x32xf32>
    %c0_1 = arith.constant 0 : index
    %c0_2 = arith.constant 0 : index
    %1 = vector.load %arg2[%c0_1, %c0_2] : memref<680x128xf32, #tpu.memory_space<vmem>>, vector<32x128xf32>
    %2 = arith.truncf %1 : vector<32x128xf32> to vector<32x128xbf16>
    %c128 = arith.constant 128 : index
    %c0_3 = arith.constant 0 : index
    %3 = vector.load %arg2[%c128, %c0_3] : memref<680x128xf32, #tpu.memory_space<vmem>>, vector<1x128xf32>
    %4 = arith.truncf %0 : vector<32x32xf32> to vector<32x32xbf16>
    %cst = arith.constant dense<0.000000e+00> : vector<32x128xf32>
    %5 = tpu.matmul %4, %2, %cst {dimension_numbers = #tpu.dot_dimension_numbers<[1], [0], [0], [1], [0, 0, 1, 1], [], []>} : vector<32x32xbf16>, vector<32x128xbf16>, vector<32x128xf32> -> vector<32x128xf32>
    %6 = vector.broadcast %3 : vector<1x128xf32> to vector<32x128xf32>
    %7 = arith.addf %5, %6 : vector<32x128xf32>
    %cst_4 = arith.constant 5.000000e-01 : f32
    %8 = vector.broadcast %cst_4 : f32 to vector<32x128xf32>
    %9 = arith.mulf %8, %7 : vector<32x128xf32>
    %cst_5 = arith.constant 0.707106769 : f32
    %10 = vector.broadcast %cst_5 : f32 to vector<32x128xf32>
    %11 = arith.mulf %7, %10 : vector<32x128xf32>
    %12 = math.erf %11 : vector<32x128xf32>
    %cst_6 = arith.constant 1.000000e+00 : f32
    %13 = vector.broadcast %cst_6 : f32 to vector<32x128xf32>
    %14 = arith.addf %13, %12 : vector<32x128xf32>
    %15 = arith.mulf %9, %14 : vector<32x128xf32>
    %c136 = arith.constant 136 : index
    %c0_7 = arith.constant 0 : index
    %16 = vector.load %arg2[%c136, %c0_7] : memref<680x128xf32, #tpu.memory_space<vmem>>, vector<128x128xf32>
    %17 = arith.truncf %16 : vector<128x128xf32> to vector<128x128xbf16>
    %c264 = arith.constant 264 : index
    %c0_8 = arith.constant 0 : index
    %18 = vector.load %arg2[%c264, %c0_8] : memref<680x128xf32, #tpu.memory_space<vmem>>, vector<1x128xf32>
    %19 = arith.truncf %15 : vector<32x128xf32> to vector<32x128xbf16>
    %cst_9 = arith.constant dense<0.000000e+00> : vector<32x128xf32>
    %20 = tpu.matmul %19, %17, %cst_9 {dimension_numbers = #tpu.dot_dimension_numbers<[1], [0], [0], [1], [0, 0, 1, 1], [], []>} : vector<32x128xbf16>, vector<128x128xbf16>, vector<32x128xf32> -> vector<32x128xf32>
    %21 = vector.broadcast %18 : vector<1x128xf32> to vector<32x128xf32>
    %22 = arith.addf %20, %21 : vector<32x128xf32>
    %cst_10 = arith.constant 5.000000e-01 : f32
    %23 = vector.broadcast %cst_10 : f32 to vector<32x128xf32>
    %24 = arith.mulf %23, %22 : vector<32x128xf32>
    %cst_11 = arith.constant 0.707106769 : f32
    %25 = vector.broadcast %cst_11 : f32 to vector<32x128xf32>
    %26 = arith.mulf %22, %25 : vector<32x128xf32>
    %27 = math.erf %26 : vector<32x128xf32>
    %cst_12 = arith.constant 1.000000e+00 : f32
    %28 = vector.broadcast %cst_12 : f32 to vector<32x128xf32>
    %29 = arith.addf %28, %27 : vector<32x128xf32>
    %30 = arith.mulf %24, %29 : vector<32x128xf32>
    %c272 = arith.constant 272 : index
    %c0_13 = arith.constant 0 : index
    %31 = vector.load %arg2[%c272, %c0_13] : memref<680x128xf32, #tpu.memory_space<vmem>>, vector<128x128xf32>
    %32 = arith.truncf %31 : vector<128x128xf32> to vector<128x128xbf16>
    %c400 = arith.constant 400 : index
    %c0_14 = arith.constant 0 : index
    %33 = vector.load %arg2[%c400, %c0_14] : memref<680x128xf32, #tpu.memory_space<vmem>>, vector<1x128xf32>
    %34 = arith.truncf %30 : vector<32x128xf32> to vector<32x128xbf16>
    %cst_15 = arith.constant dense<0.000000e+00> : vector<32x128xf32>
    %35 = tpu.matmul %34, %32, %cst_15 {dimension_numbers = #tpu.dot_dimension_numbers<[1], [0], [0], [1], [0, 0, 1, 1], [], []>} : vector<32x128xbf16>, vector<128x128xbf16>, vector<32x128xf32> -> vector<32x128xf32>
    %36 = vector.broadcast %33 : vector<1x128xf32> to vector<32x128xf32>
    %37 = arith.addf %35, %36 : vector<32x128xf32>
    %cst_16 = arith.constant 5.000000e-01 : f32
    %38 = vector.broadcast %cst_16 : f32 to vector<32x128xf32>
    %39 = arith.mulf %38, %37 : vector<32x128xf32>
    %cst_17 = arith.constant 0.707106769 : f32
    %40 = vector.broadcast %cst_17 : f32 to vector<32x128xf32>
    %41 = arith.mulf %37, %40 : vector<32x128xf32>
    %42 = math.erf %41 : vector<32x128xf32>
    %cst_18 = arith.constant 1.000000e+00 : f32
    %43 = vector.broadcast %cst_18 : f32 to vector<32x128xf32>
    %44 = arith.addf %43, %42 : vector<32x128xf32>
    %45 = arith.mulf %39, %44 : vector<32x128xf32>
    %c408 = arith.constant 408 : index
    %c0_19 = arith.constant 0 : index
    %46 = vector.load %arg2[%c408, %c0_19] : memref<680x128xf32, #tpu.memory_space<vmem>>, vector<128x128xf32>
    %47 = arith.truncf %46 : vector<128x128xf32> to vector<128x128xbf16>
    %c536 = arith.constant 536 : index
    %c0_20 = arith.constant 0 : index
    %48 = vector.load %arg2[%c536, %c0_20] : memref<680x128xf32, #tpu.memory_space<vmem>>, vector<1x128xf32>
    %49 = arith.truncf %45 : vector<32x128xf32> to vector<32x128xbf16>
    %cst_21 = arith.constant dense<0.000000e+00> : vector<32x128xf32>
    %50 = tpu.matmul %49, %47, %cst_21 {dimension_numbers = #tpu.dot_dimension_numbers<[1], [0], [0], [1], [0, 0, 1, 1], [], []>} : vector<32x128xbf16>, vector<128x128xbf16>, vector<32x128xf32> -> vector<32x128xf32>
    %51 = vector.broadcast %48 : vector<1x128xf32> to vector<32x128xf32>
    %52 = arith.addf %50, %51 : vector<32x128xf32>
    %cst_22 = arith.constant 5.000000e-01 : f32
    %53 = vector.broadcast %cst_22 : f32 to vector<32x128xf32>
    %54 = arith.mulf %53, %52 : vector<32x128xf32>
    %cst_23 = arith.constant 0.707106769 : f32
    %55 = vector.broadcast %cst_23 : f32 to vector<32x128xf32>
    %56 = arith.mulf %52, %55 : vector<32x128xf32>
    %57 = math.erf %56 : vector<32x128xf32>
    %cst_24 = arith.constant 1.000000e+00 : f32
    %58 = vector.broadcast %cst_24 : f32 to vector<32x128xf32>
    %59 = arith.addf %58, %57 : vector<32x128xf32>
    %60 = arith.mulf %54, %59 : vector<32x128xf32>
    %c544 = arith.constant 544 : index
    %c0_25 = arith.constant 0 : index
    %61 = vector.load %arg2[%c544, %c0_25] : memref<680x128xf32, #tpu.memory_space<vmem>>, vector<128x128xf32>
    %62 = arith.truncf %61 : vector<128x128xf32> to vector<128x128xbf16>
    %c672 = arith.constant 672 : index
    %c0_26 = arith.constant 0 : index
    %63 = vector.load %arg2[%c672, %c0_26] : memref<680x128xf32, #tpu.memory_space<vmem>>, vector<1x128xf32>
    %64 = arith.truncf %60 : vector<32x128xf32> to vector<32x128xbf16>
    %cst_27 = arith.constant dense<0.000000e+00> : vector<32x128xf32>
    %65 = tpu.matmul %64, %62, %cst_27 {dimension_numbers = #tpu.dot_dimension_numbers<[1], [0], [0], [1], [0, 0, 1, 1], [], []>} : vector<32x128xbf16>, vector<128x128xbf16>, vector<32x128xf32> -> vector<32x128xf32>
    %66 = vector.broadcast %63 : vector<1x128xf32> to vector<32x128xf32>
    %67 = arith.addf %65, %66 : vector<32x128xf32>
    %68 = vector.extract_strided_slice %67 {offsets = [0, 0], sizes = [32, 1], strides = [1, 1]} : vector<32x128xf32> to vector<32x1xf32>
    %c0_28 = arith.constant 0 : index
    %c0_29 = arith.constant 0 : index
    %69 = vector.load %arg3[%c0_28, %c0_29] : memref<32x1xf32, #tpu.memory_space<vmem>>, vector<32x1xf32>
    tpu.vector_store %arg3[%c0_28, %c0_29], %68 {strides = array<i32>} : memref<32x1xf32, #tpu.memory_space<vmem>>, vector<32x1xf32>,
    return
  }
  func.func @transform_0(%arg0: i32) -> (i32, i32) {
    %c0_i32 = arith.constant 0 : i32
    %c0_i32_0 = arith.constant 0 : i32
    return %arg0, %c0_i32 : i32, i32
  }
  func.func @transform_1(%arg0: i32) -> (i32, i32) {
    %c0_i32 = arith.constant 0 : i32
    %c0_i32_0 = arith.constant 0 : i32
    %c0_i32_1 = arith.constant 0 : i32
    return %c0_i32, %c0_i32_0 : i32, i32
  }
  func.func @transform_2(%arg0: i32) -> (i32, i32) {
    %c0_i32 = arith.constant 0 : i32
    %c0_i32_0 = arith.constant 0 : i32
    return %arg0, %c0_i32 : i32, i32
  }
}

</mosaic_0001>

<llo_original>
// kernel: tpu_custom_call.1
$region0: #{tpu_custom_call.1}
  #allocation0 [shape = 'u32[]', space=smem, size = 0x4, offset = 0x4, fixed_abs, tag = 'smem constant byte address 0x4 - core index']
  #allocation1 [shape = 'u32[144,128]{1,0:T(1,128)}', space=vmem, size = 0x12000, scoped, tag = 'internal scratch']
  %s0 = inlined_call_operand.vmem [shape: f32[128,32], index: 0, kind: input, shape index: {}]
  %s1 = inlined_call_operand.hbm [shape: f32[680,128], index: 1, kind: input, shape index: {}]
  %s2 = inlined_call_operand.vmem [shape: f32[128,1], index: 2, kind: output, shape index: {}]
  %s3 = sld [smem:[#allocation0]]
  $region45: #{tpu_custom_call.1} parent=0
    _
  %s5 = ssub.s32 1, %s3
  %s6 = scalar_select 0, %s5, %s3
  $region1: #{tpu_custom_call.1} parent=0
    #allocation2 [shape = 'u8[348160]{0}', space=vmem, size = 0x55000, scoped, tag = 'input window, operand 1, single buffered']
    #allocation3 [shape = 's32[2]{0}', space=sflag, size = 0x8, scoped, tag = 'scoped memory for tpu_custom_call.1']
    %7 = vsyncpa [#allocation3], 0
    loop: start=0, step=1, limit=6
    $region2: #{tpu_custom_call.1} parent=1 // loop_pre_header
      _
    $region3: #{tpu_custom_call.1} parent=1 // loop_header
      %s9 = sphi 0, %s13
      %p10 = scmp.ge.s32.totalorder %s9, 6
      %s19 = sphi 0, %s21
      %s22 = sphi 0, %s19
      %s23 = sphi 0, %s22
      %s39 = sphi 0, %s23
      %s43 = sphi 0, %s43
      %s45 = sphi 0, %s43
      %s46 = sphi 0, %s45
      %s60 = sphi 0, %s46
      %s66 = sphi 0, %s68
      %s69 = sphi 0, %s66
      %s70 = sphi 0, %s69
      %s86 = sphi 0, %s70
    $region4: #{tpu_custom_call.1} parent=1 // loop_header_branch
      %12 = sbr.rel (%p10) target = $region8
    $region5: #{tpu_custom_call.1} parent=1 // loop_body
      %s14 = ssub.s32 %s9, 1
      %s15 = ssub.s32 %s9, 2
      %s16 = sadd.s32 %s9, 1
      %s17 = ssub.s32 %s9, %s16
      %p18 = scmp.eq.s32.totalorder %s17, 0
      %s20 = sadd.s32 %s19, 1
      %s21 = scalar_select %p18, %s19, %s20
      %p24 = pneg %p18
      %p25 = scmp.eq.s32.totalorder %s9, 3
      %p26 = por %p24, %p25
      %p27 = scmp.ne.s32.totalorder %s19, %s22
      %p28 = scmp.eq.s32.totalorder %s9, 0
      %p29 = por %p27, %p28
      %p30 = scmp.ne.s32.totalorder %s19, %s22
      %p31 = scmp.eq.s32.totalorder %s14, 3
      %p32 = por %p30, %p31
      %p33 = scmp.ne.s32.totalorder %s22, %s23
      %p34 = scmp.eq.s32.totalorder %s14, 0
      %p35 = por %p33, %p34
      %p36 = scmp.ne.s32.totalorder %s22, %s23
      %p37 = scmp.eq.s32.totalorder %s15, 3
      %p38 = por %p36, %p37
      %p40 = scmp.ne.s32.totalorder %s23, %s39
      %p41 = scmp.eq.s32.totalorder %s15, 0
      %p42 = por %p40, %p41
      %s44 = sadd.s32 %s43, 1
      %p47 = scmp.eq.s32.totalorder %s9, 3
      %p48 = scmp.ne.s32.totalorder %s43, %s45
      %p49 = scmp.eq.s32.totalorder %s9, 0
      %p50 = por %p48, %p49
      %p51 = scmp.ne.s32.totalorder %s43, %s45
      %p52 = scmp.eq.s32.totalorder %s14, 3
      %p53 = por %p51, %p52
      %p54 = scmp.ne.s32.totalorder %s45, %s46
      %p55 = scmp.eq.s32.totalorder %s14, 0
      %p56 = por %p54, %p55
      %p57 = scmp.ne.s32.totalorder %s45, %s46
      %p58 = scmp.eq.s32.totalorder %s15, 3
      %p59 = por %p57, %p58
      %p61 = scmp.ne.s32.totalorder %s46, %s60
      %p62 = scmp.eq.s32.totalorder %s15, 0
      %p63 = por %p61, %p62
      %s64 = ssub.s32 %s9, %s16
      %p65 = scmp.eq.s32.totalorder %s64, 0
      %s67 = sadd.s32 %s66, 1
      %s68 = scalar_select %p65, %s66, %s67
      %p71 = pneg %p65
      %p72 = scmp.eq.s32.totalorder %s9, 3
      %p73 = por %p71, %p72
      %p74 = scmp.ne.s32.totalorder %s66, %s69
      %p75 = scmp.eq.s32.totalorder %s9, 0
      %p76 = por %p74, %p75
      %p77 = scmp.ne.s32.totalorder %s66, %s69
      %p78 = scmp.eq.s32.totalorder %s14, 3
      %p79 = por %p77, %p78
      %p80 = scmp.ne.s32.totalorder %s69, %s70
      %p81 = scmp.eq.s32.totalorder %s14, 0
      %p82 = por %p80, %p81
      %p83 = scmp.ne.s32.totalorder %s69, %s70
      %p84 = scmp.eq.s32.totalorder %s15, 3
      %p85 = por %p83, %p84
      %p87 = scmp.ne.s32.totalorder %s70, %s86
      %p88 = scmp.eq.s32.totalorder %s15, 0
      %p89 = por %p87, %p88
      %p90 = scmp.le.s32.totalorder 1, %s9
      %p91 = scmp.lt.s32.totalorder %s9, 5
      %p92 = pnand %p90, %p91
      %p93 = pneg %p92
      // Predicated region
      $region9: #{tpu_custom_call.1} parent=5 // pred_check
        _
      $region10: #{tpu_custom_call.1} parent=5 // pred_check_branch
        %95 = sbr.rel (%p92) target = $region12
      $region11: #{tpu_custom_call.1} parent=5 // pred_region
        %s96 = ssub.s32 %s9, 1
        // Predicated region
        $region13: #{tpu_custom_call.1} parent=11 // pred_check
          %p97 = pneg %p56
        $region14: #{tpu_custom_call.1} parent=11 // pred_check_branch
          %99 = sbr.rel (%p97) target = $region16
        $region15: #{tpu_custom_call.1} parent=11 // pred_region
          %s101 = ssub.s32 10880, 10880
          %102 = vsyncadd [#allocation3], %s101
          %s103 = sshll.u32 [#allocation2], 4
          %s104 = int_to_ptr.vmem [resolvable:$true] %s103
          %109 = dma.hbm_to_vmem [thread:$0]  %s1, 10880, %s104, [#allocation3], 128, 128, 8
        $region16: #{tpu_custom_call.1} parent=11 // pred_fallthru
          _
      $region12: #{tpu_custom_call.1} parent=5 // pred_fallthru
        _
      %p110 = scmp.lt.s32.totalorder %s9, 4
      // Predicated region
      $region17: #{tpu_custom_call.1} parent=5 // pred_check
        %p111 = pneg %p110
      $region18: #{tpu_custom_call.1} parent=5 // pred_check_branch
        %113 = sbr.rel (%p111) target = $region20
      $region19: #{tpu_custom_call.1} parent=5 // pred_region
        // Predicated region
        $region21: #{tpu_custom_call.1} parent=19 // pred_check
          %p114 = pneg %p29
        $region22: #{tpu_custom_call.1} parent=19 // pred_check_branch
          %116 = sbr.rel (%p114) target = $region24
        $region23: #{tpu_custom_call.1} parent=19 // pred_region
          %s117 = smul.u32 4, %s9
          %p118 = scmp.lt.s32.totalorder %s117, 15
          %s119 = scalar_select %p118, %s117, 15
          %s120 = smul.addr %s119, 8
          %s121 = scalar_lea.vmem %s0, %s120
          %s122 = smul.u32 4, %s9
        $region24: #{tpu_custom_call.1} parent=19 // pred_fallthru
          _
      $region20: #{tpu_custom_call.1} parent=5 // pred_fallthru
        _
      %p123 = scmp.le.s32.totalorder 1, %s9
      %p124 = scmp.lt.s32.totalorder %s9, 5
      %p125 = pnand %p123, %p124
      %p126 = pneg %p125
      // Predicated region
      $region25: #{tpu_custom_call.1} parent=5 // pred_check
        _
      $region26: #{tpu_custom_call.1} parent=5 // pred_check_branch
        %128 = sbr.rel (%p125) target = $region28
      $region27: #{tpu_custom_call.1} parent=5 // pred_region
        %s129 = ssub.s32 %s9, 1
        // Predicated region
        $region29: #{tpu_custom_call.1} parent=27 // pred_check
          %p130 = pneg %p56
        $region30: #{tpu_custom_call.1} parent=27 // pred_check_branch
          %132 = sbr.rel (%p130) target = $region32
        $region31: #{tpu_custom_call.1} parent=27 // pred_region
          %133 = dma.done [#allocation3], 10880
        $region32: #{tpu_custom_call.1} parent=27 // pred_fallthru
          _
        %s134 = smul.u32 4, %s14
        %p135 = scmp.lt.s32.totalorder %s134, 15
        %s136 = scalar_select %p135, %s134, 15
        %s137 = smul.addr %s136, 8
        %s138 = scalar_lea.vmem %s0, %s137
        %p139 = pneg %p35
        %p140 = pneg %p32
        %p141 = pneg %p56
        %p142 = pneg %p53
        %p143 = pneg %p82
        %p144 = pneg %p79
        %s145 = smul.u32 4, %s14
        %p146 = scmp.lt.s32.totalorder %s145, 15
        %s147 = scalar_select %p146, %s145, 15
        %s148 = smul.addr %s147, 8
        %s149 = scalar_lea.vmem %s2, %s148
        %s150 = smul.u32 4, %s14
        %p151 = scmp.lt.s32.totalorder %s150, 15
        %s152 = scalar_select %p151, %s150, 15
        %s153 = smul.addr %s152, 8
        %s154 = scalar_lea.vmem %s0, %s153
        %s155 = smul.u32 4, %s14
        %s156 = smul.u32 4, %s14
        %p157 = scmp.lt.s32.totalorder %s156, 15
        %s158 = scalar_select %p157, %s156, 15
        %s159 = smul.addr %s158, 8
        %s160 = scalar_lea.vmem %s2, %s159
        %s161 = smul.u32 4, %s14
        %v163 = vld [vmem:[%s154] sm:$0xff]
        %v164 = vld [vmem:[%s154 + $0x8] sm:$0xff]
        %v165 = vld [vmem:[%s154 + $0x10] sm:$0xff]
        %v166 = vld [vmem:[%s154 + $0x18] sm:$0xff]
        %v167 = vld [vmem:[#allocation2] sm:$0xff]
        %v168 = vld [vmem:[#allocation2 + $0x8] sm:$0xff]
        %v169 = vld [vmem:[#allocation2 + $0x10] sm:$0xff]
        %v170 = vld [vmem:[#allocation2 + $0x18] sm:$0xff]
        %v171 = vpack.c.bf16 %v168, %v167
        %v172 = vpack.c.bf16 %v170, %v169
        %v173 = vld [vmem:[#allocation2 + $0x80] sm:$0x1]
        %v174 = vpack.c.bf16 %v164, %v163
        %v175 = vpack.c.bf16 %v166, %v165
        %v176 = vlaneseq
        %v177 = vshrl.u32 %v176, 7
        %v178 = vsub.s32 0, %v177
        %v179 = vrot.slane %v173, %v178
        %vm180 = vcmask 261120
        %v182 = vsel %vm180, %v174, 0
        %v185 = vsel %vm180, %v175, 0
        %187 = vmatprep.subr.bf16.mxu0 0
        %188 = vmatpush1.bf16.msra.mxu0 %v171
        %189 = vmatprep.subr.bf16.mxu0 0
        %190 = vmatpush1.bf16.msra.mxu0 %v172
        %191 = vmatprep.subr.bf16.mxu0 0
        %192 = vmatpush1.bf16.msra.mxu0 0
        %193 = vmatprep.subr.bf16.mxu0 0
        %194 = vmatpush1.bf16.msra.mxu0 0
        %195 = vmatprep.subr.bf16.mxu0 0
        %196 = vmatpush1.bf16.msra.mxu0 0
        %197 = vmatprep.subr.bf16.mxu0 0
        %198 = vmatpush1.bf16.msra.mxu0 0
        %199 = vmatprep.subr.bf16.mxu0 0
        %200 = vmatpush1.bf16.msra.mxu0 0
        %201 = vmatprep.subr.bf16.mxu0 0
        %202 = vmatpush1.bf16.msra.mxu0 0
        %203 = vmatprep.subr.bf16.mxu0 0
        %204 = vmatpush1.bf16.msra.mxu0 0
        %205 = vmatprep.subr.bf16.mxu0 0
        %206 = vmatpush1.bf16.msra.mxu0 0
        %207 = vmatprep.subr.bf16.mxu0 0
        %208 = vmatpush1.bf16.msra.mxu0 0
        %209 = vmatprep.subr.bf16.mxu0 0
        %210 = vmatpush1.bf16.msra.mxu0 0
        %211 = vmatprep.subr.bf16.mxu0 0
        %212 = vmatpush1.bf16.msra.mxu0 0
        %213 = vmatprep.subr.bf16.mxu0 0
        %214 = vmatpush1.bf16.msra.mxu0 0
        %215 = vmatprep.subr.bf16.mxu0 0
        %216 = vmatpush1.bf16.msra.mxu0 0
        %217 = vmatprep.subr.bf16.mxu0 0
        %218 = vmatpush1.bf16.msra.mxu0 0
        %219 = vmatprep.mubr.bf16.mxu0 0
        %220 = vmatmul.mubr.bf16.gmra.mrb[0].mxu0 %v182
        %v221 = vpop.f32.mrb[0].mxu0
        %v222 = vadd.f32 %v179, %v221
        %v223 = vpop.f32.mrb[0].mxu0
        %v224 = vpop.f32.mrb[0].mxu0
        %v225 = vadd.f32 %v179, %v224
        %v226 = vpop.f32.mrb[0].mxu0
        %227 = vmatprep.mubr.bf16.mxu0 0
        %228 = vmatmul.mubr.bf16.gmra.mrb[0].mxu0 %v185
        %v229 = vpop.f32.mrb[0].mxu0
        %v230 = vadd.f32 %v179, %v229
        %v231 = vpop.f32.mrb[0].mxu0
        %v232 = vpop.f32.mrb[0].mxu0
        %v233 = vadd.f32 %v179, %v232
        %v234 = vpop.f32.mrb[0].mxu0
        %235 = vdwg.mxu0
        %v236 = vmul.f32 %v222, 0.5
        %v237 = vmul.f32 %v225, 0.5
        %v238 = vmul.f32 %v230, 0.5
        %v239 = vmul.f32 %v233, 0.5
        %v240 = vmul.f32 %v222, 0.70710677
        %v241 = vmul.f32 %v225, 0.70710677
        %v242 = vmul.f32 %v230, 0.70710677
        %v243 = vmul.f32 %v233, 0.70710677
        %v244 = verf.f32.pop %v240
        %v245 = verf.f32.pop %v241
        %v246 = verf.f32.pop %v242
        %v247 = verf.f32.pop %v243
        %v248 = vadd.f32 %v244, 1.0
        %v249 = vadd.f32 %v245, 1.0
        %v250 = vadd.f32 %v246, 1.0
        %v251 = vadd.f32 %v247, 1.0
        %v252 = vmul.f32 %v236, %v248
        %v253 = vmul.f32 %v237, %v249
        %v254 = vmul.f32 %v238, %v250
        %v255 = vmul.f32 %v239, %v251
        %v256 = vld [vmem:[#allocation2 + $0x88] sm:$0xff]
        %v257 = vld [vmem:[#allocation2 + $0x90] sm:$0xff]
        %v258 = vld [vmem:[#allocation2 + $0x98] sm:$0xff]
        %v259 = vld [vmem:[#allocation2 + $0xa0] sm:$0xff]
        %v260 = vld [vmem:[#allocation2 + $0xa8] sm:$0xff]
        %v261 = vld [vmem:[#allocation2 + $0xb0] sm:$0xff]
        %v262 = vld [vmem:[#allocation2 + $0xb8] sm:$0xff]
        %v263 = vld [vmem:[#allocation2 + $0xc0] sm:$0xff]
        %v264 = vld [vmem:[#allocation2 + $0xc8] sm:$0xff]
        %v265 = vld [vmem:[#allocation2 + $0xd0] sm:$0xff]
        %v266 = vld [vmem:[#allocation2 + $0xd8] sm:$0xff]
        %v267 = vld [vmem:[#allocation2 + $0xe0] sm:$0xff]
        %v268 = vld [vmem:[#allocation2 + $0xe8] sm:$0xff]
        %v269 = vld [vmem:[#allocation2 + $0xf0] sm:$0xff]
        %v270 = vld [vmem:[#allocation2 + $0xf8] sm:$0xff]
        %v271 = vld [vmem:[#allocation2 + $0x100] sm:$0xff]
        %v272 = vpack.c.bf16 %v257, %v256
        %v273 = vpack.c.bf16 %v259, %v258
        %v274 = vpack.c.bf16 %v261, %v260
        %v275 = vpack.c.bf16 %v263, %v262
        %v276 = vpack.c.bf16 %v265, %v264
        %v277 = vpack.c.bf16 %v267, %v266
        %v278 = vpack.c.bf16 %v269, %v268
        %v279 = vpack.c.bf16 %v271, %v270
        %v280 = vld [vmem:[#allocation2 + $0x108] sm:$0x1]
        %v281 = vpack.c.bf16 %v253, %v252
        %v282 = vpack.c.bf16 %v255, %v254
        %v283 = vlaneseq
        %v284 = vshrl.u32 %v283, 7
        %v285 = vsub.s32 0, %v284
        %v286 = vrot.slane %v280, %v285
        %287 = vmatprep.subr.bf16.mxu0 0
        %288 = vmatpush1.bf16.msra.mxu0 %v272
        %289 = vmatprep.subr.bf16.mxu0 0
        %290 = vmatpush1.bf16.msra.mxu0 %v273
        %291 = vmatprep.subr.bf16.mxu0 0
        %292 = vmatpush1.bf16.msra.mxu0 %v274
        %293 = vmatprep.subr.bf16.mxu0 0
        %294 = vmatpush1.bf16.msra.mxu0 %v275
        %295 = vmatprep.subr.bf16.mxu0 0
        %296 = vmatpush1.bf16.msra.mxu0 %v276
        %297 = vmatprep.subr.bf16.mxu0 0
        %298 = vmatpush1.bf16.msra.mxu0 %v277
        %299 = vmatprep.subr.bf16.mxu0 0
        %300 = vmatpush1.bf16.msra.mxu0 %v278
        %301 = vmatprep.subr.bf16.mxu0 0
        %302 = vmatpush1.bf16.msra.mxu0 %v279
        %303 = vmatprep.subr.bf16.mxu0 0
        %304 = vmatpush1.bf16.msra.mxu0 0
        %305 = vmatprep.subr.bf16.mxu0 0
        %306 = vmatpush1.bf16.msra.mxu0 0
        %307 = vmatprep.subr.bf16.mxu0 0
        %308 = vmatpush1.bf16.msra.mxu0 0
        %309 = vmatprep.subr.bf16.mxu0 0
        %310 = vmatpush1.bf16.msra.mxu0 0
        %311 = vmatprep.subr.bf16.mxu0 0
        %312 = vmatpush1.bf16.msra.mxu0 0
        %313 = vmatprep.subr.bf16.mxu0 0
        %314 = vmatpush1.bf16.msra.mxu0 0
        %315 = vmatprep.subr.bf16.mxu0 0
        %316 = vmatpush1.bf16.msra.mxu0 0
        %317 = vmatprep.subr.bf16.mxu0 0
        %318 = vmatpush1.bf16.msra.mxu0 0
        %319 = vmatprep.mubr.bf16.mxu0 0
        %320 = vmatmul.mubr.bf16.gmra.mrb[0].mxu0 %v281
        %v321 = vpop.f32.mrb[0].mxu0
        %v322 = vadd.f32 %v286, %v321
        %v323 = vpop.f32.mrb[0].mxu0
        %v324 = vpop.f32.mrb[0].mxu0
        %v325 = vadd.f32 %v286, %v324
        %v326 = vpop.f32.mrb[0].mxu0
        %327 = vmatprep.mubr.bf16.mxu0 0
        %328 = vmatmul.mubr.bf16.gmra.mrb[0].mxu0 %v282
        %v329 = vpop.f32.mrb[0].mxu0
        %v330 = vadd.f32 %v286, %v329
        %v331 = vpop.f32.mrb[0].mxu0
        %v332 = vpop.f32.mrb[0].mxu0
        %v333 = vadd.f32 %v286, %v332
        %v334 = vpop.f32.mrb[0].mxu0
        %335 = vdwg.mxu0
        %v336 = vmul.f32 %v322, 0.5
        %v337 = vmul.f32 %v325, 0.5
        %v338 = vmul.f32 %v330, 0.5
        %v339 = vmul.f32 %v333, 0.5
        %v340 = vmul.f32 %v322, 0.70710677
        %v341 = vmul.f32 %v325, 0.70710677
        %v342 = vmul.f32 %v330, 0.70710677
        %v343 = vmul.f32 %v333, 0.70710677
        %v344 = verf.f32.pop %v340
        %v345 = verf.f32.pop %v341
        %v346 = verf.f32.pop %v342
        %v347 = verf.f32.pop %v343
        %v348 = vadd.f32 %v344, 1.0
        %v349 = vadd.f32 %v345, 1.0
        %v350 = vadd.f32 %v346, 1.0
        %v351 = vadd.f32 %v347, 1.0
        %v352 = vmul.f32 %v336, %v348
        %v353 = vmul.f32 %v337, %v349
        %v354 = vmul.f32 %v338, %v350
        %v355 = vmul.f32 %v339, %v351
        %v356 = vld [vmem:[#allocation2 + $0x110] sm:$0xff]
        %v357 = vld [vmem:[#allocation2 + $0x118] sm:$0xff]
        %v358 = vld [vmem:[#allocation2 + $0x120] sm:$0xff]
        %v359 = vld [vmem:[#allocation2 + $0x128] sm:$0xff]
        %v360 = vld [vmem:[#allocation2 + $0x130] sm:$0xff]
        %v361 = vld [vmem:[#allocation2 + $0x138] sm:$0xff]
        %v362 = vld [vmem:[#allocation2 + $0x140] sm:$0xff]
        %v363 = vld [vmem:[#allocation2 + $0x148] sm:$0xff]
        %v364 = vld [vmem:[#allocation2 + $0x150] sm:$0xff]
        %v365 = vld [vmem:[#allocation2 + $0x158] sm:$0xff]
        %v366 = vld [vmem:[#allocation2 + $0x160] sm:$0xff]
        %v367 = vld [vmem:[#allocation2 + $0x168] sm:$0xff]
        %v368 = vld [vmem:[#allocation2 + $0x170] sm:$0xff]
        %v369 = vld [vmem:[#allocation2 + $0x178] sm:$0xff]
        %v370 = vld [vmem:[#allocation2 + $0x180] sm:$0xff]
        %v371 = vld [vmem:[#allocation2 + $0x188] sm:$0xff]
        %v372 = vpack.c.bf16 %v357, %v356
        %v373 = vpack.c.bf16 %v359, %v358
        %v374 = vpack.c.bf16 %v361, %v360
        %v375 = vpack.c.bf16 %v363, %v362
        %v376 = vpack.c.bf16 %v365, %v364
        %v377 = vpack.c.bf16 %v367, %v366
        %v378 = vpack.c.bf16 %v369, %v368
        %v379 = vpack.c.bf16 %v371, %v370
        %v380 = vld [vmem:[#allocation2 + $0x190] sm:$0x1]
        %v381 = vpack.c.bf16 %v353, %v352
        %v382 = vpack.c.bf16 %v355, %v354
        %v383 = vlaneseq
        %v384 = vshrl.u32 %v383, 7
        %v385 = vsub.s32 0, %v384
        %v386 = vrot.slane %v380, %v385
        %387 = vmatprep.subr.bf16.mxu0 0
        %388 = vmatpush1.bf16.msra.mxu0 %v372
        %389 = vmatprep.subr.bf16.mxu0 0
        %390 = vmatpush1.bf16.msra.mxu0 %v373
        %391 = vmatprep.subr.bf16.mxu0 0
        %392 = vmatpush1.bf16.msra.mxu0 %v374
        %393 = vmatprep.subr.bf16.mxu0 0
        %394 = vmatpush1.bf16.msra.mxu0 %v375
        %395 = vmatprep.subr.bf16.mxu0 0
        %396 = vmatpush1.bf16.msra.mxu0 %v376
        %397 = vmatprep.subr.bf16.mxu0 0
        %398 = vmatpush1.bf16.msra.mxu0 %v377
        %399 = vmatprep.subr.bf16.mxu0 0
        %400 = vmatpush1.bf16.msra.mxu0 %v378
        %401 = vmatprep.subr.bf16.mxu0 0
        %402 = vmatpush1.bf16.msra.mxu0 %v379
        %403 = vmatprep.subr.bf16.mxu0 0
        %404 = vmatpush1.bf16.msra.mxu0 0
        %405 = vmatprep.subr.bf16.mxu0 0
        %406 = vmatpush1.bf16.msra.mxu0 0
        %407 = vmatprep.subr.bf16.mxu0 0
        %408 = vmatpush1.bf16.msra.mxu0 0
        %409 = vmatprep.subr.bf16.mxu0 0
        %410 = vmatpush1.bf16.msra.mxu0 0
        %411 = vmatprep.subr.bf16.mxu0 0
        %412 = vmatpush1.bf16.msra.mxu0 0
        %413 = vmatprep.subr.bf16.mxu0 0
        %414 = vmatpush1.bf16.msra.mxu0 0
        %415 = vmatprep.subr.bf16.mxu0 0
        %416 = vmatpush1.bf16.msra.mxu0 0
        %417 = vmatprep.subr.bf16.mxu0 0
        %418 = vmatpush1.bf16.msra.mxu0 0
        %419 = vmatprep.mubr.bf16.mxu0 0
        %420 = vmatmul.mubr.bf16.gmra.mrb[0].mxu0 %v381
        %v421 = vpop.f32.mrb[0].mxu0
        %v422 = vadd.f32 %v386, %v421
        %v423 = vpop.f32.mrb[0].mxu0
        %v424 = vpop.f32.mrb[0].mxu0
        %v425 = vadd.f32 %v386, %v424
        %v426 = vpop.f32.mrb[0].mxu0
        %427 = vmatprep.mubr.bf16.mxu0 0
        %428 = vmatmul.mubr.bf16.gmra.mrb[0].mxu0 %v382
        %v429 = vpop.f32.mrb[0].mxu0
        %v430 = vadd.f32 %v386, %v429
        %v431 = vpop.f32.mrb[0].mxu0
        %v432 = vpop.f32.mrb[0].mxu0
        %v433 = vadd.f32 %v386, %v432
        %v434 = vpop.f32.mrb[0].mxu0
        %435 = vdwg.mxu0
        %v436 = vmul.f32 %v422, 0.5
        %v437 = vmul.f32 %v425, 0.5
        %v438 = vmul.f32 %v430, 0.5
        %v439 = vmul.f32 %v433, 0.5
        %v440 = vmul.f32 %v422, 0.70710677
        %v441 = vmul.f32 %v425, 0.70710677
        %v442 = vmul.f32 %v430, 0.70710677
        %v443 = vmul.f32 %v433, 0.70710677
        %v444 = verf.f32.pop %v440
        %v445 = verf.f32.pop %v441
        %v446 = verf.f32.pop %v442
        %v447 = verf.f32.pop %v443
        %v448 = vadd.f32 %v444, 1.0
        %v449 = vadd.f32 %v445, 1.0
        %v450 = vadd.f32 %v446, 1.0
        %v451 = vadd.f32 %v447, 1.0
        %v452 = vmul.f32 %v436, %v448
        %v453 = vmul.f32 %v437, %v449
        %v454 = vmul.f32 %v438, %v450
        %v455 = vmul.f32 %v439, %v451
        %v456 = vld [vmem:[#allocation2 + $0x198] sm:$0xff]
        %v457 = vld [vmem:[#allocation2 + $0x1a0] sm:$0xff]
        %v458 = vld [vmem:[#allocation2 + $0x1a8] sm:$0xff]
        %v459 = vld [vmem:[#allocation2 + $0x1b0] sm:$0xff]
        %v460 = vld [vmem:[#allocation2 + $0x1b8] sm:$0xff]
        %v461 = vld [vmem:[#allocation2 + $0x1c0] sm:$0xff]
        %v462 = vld [vmem:[#allocation2 + $0x1c8] sm:$0xff]
        %v463 = vld [vmem:[#allocation2 + $0x1d0] sm:$0xff]
        %v464 = vld [vmem:[#allocation2 + $0x1d8] sm:$0xff]
        %v465 = vld [vmem:[#allocation2 + $0x1e0] sm:$0xff]
        %v466 = vld [vmem:[#allocation2 + $0x1e8] sm:$0xff]
        %v467 = vld [vmem:[#allocation2 + $0x1f0] sm:$0xff]
        %v468 = vld [vmem:[#allocation2 + $0x1f8] sm:$0xff]
        %v469 = vld [vmem:[#allocation2 + $0x200] sm:$0xff]
        %v470 = vld [vmem:[#allocation2 + $0x208] sm:$0xff]
        %v471 = vld [vmem:[#allocation2 + $0x210] sm:$0xff]
        %v472 = vpack.c.bf16 %v457, %v456
        %v473 = vpack.c.bf16 %v459, %v458
        %v474 = vpack.c.bf16 %v461, %v460
        %v475 = vpack.c.bf16 %v463, %v462
        %v476 = vpack.c.bf16 %v465, %v464
        %v477 = vpack.c.bf16 %v467, %v466
        %v478 = vpack.c.bf16 %v469, %v468
        %v479 = vpack.c.bf16 %v471, %v470
        %v480 = vld [vmem:[#allocation2 + $0x218] sm:$0x1]
        %v481 = vpack.c.bf16 %v453, %v452
        %v482 = vpack.c.bf16 %v455, %v454
        %v483 = vlaneseq
        %v484 = vshrl.u32 %v483, 7
        %v485 = vsub.s32 0, %v484
        %v486 = vrot.slane %v480, %v485
        %487 = vmatprep.subr.bf16.mxu0 0
        %488 = vmatpush1.bf16.msra.mxu0 %v472
        %489 = vmatprep.subr.bf16.mxu0 0
        %490 = vmatpush1.bf16.msra.mxu0 %v473
        %491 = vmatprep.subr.bf16.mxu0 0
        %492 = vmatpush1.bf16.msra.mxu0 %v474
        %493 = vmatprep.subr.bf16.mxu0 0
        %494 = vmatpush1.bf16.msra.mxu0 %v475
        %495 = vmatprep.subr.bf16.mxu0 0
        %496 = vmatpush1.bf16.msra.mxu0 %v476
        %497 = vmatprep.subr.bf16.mxu0 0
        %498 = vmatpush1.bf16.msra.mxu0 %v477
        %499 = vmatprep.subr.bf16.mxu0 0
        %500 = vmatpush1.bf16.msra.mxu0 %v478
        %501 = vmatprep.subr.bf16.mxu0 0
        %502 = vmatpush1.bf16.msra.mxu0 %v479
        %503 = vmatprep.subr.bf16.mxu0 0
        %504 = vmatpush1.bf16.msra.mxu0 0
        %505 = vmatprep.subr.bf16.mxu0 0
        %506 = vmatpush1.bf16.msra.mxu0 0
        %507 = vmatprep.subr.bf16.mxu0 0
        %508 = vmatpush1.bf16.msra.mxu0 0
        %509 = vmatprep.subr.bf16.mxu0 0
        %510 = vmatpush1.bf16.msra.mxu0 0
        %511 = vmatprep.subr.bf16.mxu0 0
        %512 = vmatpush1.bf16.msra.mxu0 0
        %513 = vmatprep.subr.bf16.mxu0 0
        %514 = vmatpush1.bf16.msra.mxu0 0
        %515 = vmatprep.subr.bf16.mxu0 0
        %516 = vmatpush1.bf16.msra.mxu0 0
        %517 = vmatprep.subr.bf16.mxu0 0
        %518 = vmatpush1.bf16.msra.mxu0 0
        %519 = vmatprep.mubr.bf16.mxu0 0
        %520 = vmatmul.mubr.bf16.gmra.mrb[0].mxu0 %v481
        %v521 = vpop.f32.mrb[0].mxu0
        %v522 = vadd.f32 %v486, %v521
        %v523 = vpop.f32.mrb[0].mxu0
        %v524 = vpop.f32.mrb[0].mxu0
        %v525 = vadd.f32 %v486, %v524
        %v526 = vpop.f32.mrb[0].mxu0
        %527 = vmatprep.mubr.bf16.mxu0 0
        %528 = vmatmul.mubr.bf16.gmra.mrb[0].mxu0 %v482
        %v529 = vpop.f32.mrb[0].mxu0
        %v530 = vadd.f32 %v486, %v529
        %v531 = vpop.f32.mrb[0].mxu0
        %v532 = vpop.f32.mrb[0].mxu0
        %v533 = vadd.f32 %v486, %v532
        %v534 = vpop.f32.mrb[0].mxu0
        %535 = vdwg.mxu0
        %v536 = vmul.f32 %v522, 0.5
        %v537 = vmul.f32 %v525, 0.5
        %v538 = vmul.f32 %v530, 0.5
        %v539 = vmul.f32 %v533, 0.5
        %v540 = vmul.f32 %v522, 0.70710677
        %v541 = vmul.f32 %v525, 0.70710677
        %v542 = vmul.f32 %v530, 0.70710677
        %v543 = vmul.f32 %v533, 0.70710677
        %v544 = verf.f32.pop %v540
        %v545 = verf.f32.pop %v541
        %v546 = verf.f32.pop %v542
        %v547 = verf.f32.pop %v543
        %v548 = vadd.f32 %v544, 1.0
        %v549 = vadd.f32 %v545, 1.0
        %v550 = vadd.f32 %v546, 1.0
        %v551 = vadd.f32 %v547, 1.0
        %v552 = vmul.f32 %v536, %v548
        %v553 = vmul.f32 %v537, %v549
        %v554 = vmul.f32 %v538, %v550
        %v555 = vmul.f32 %v539, %v551
        %v556 = vld [vmem:[#allocation2 + $0x220] sm:$0xff]
        %v557 = vld [vmem:[#allocation2 + $0x228] sm:$0xff]
        %v558 = vld [vmem:[#allocation2 + $0x230] sm:$0xff]
        %v559 = vld [vmem:[#allocation2 + $0x238] sm:$0xff]
        %v560 = vld [vmem:[#allocation2 + $0x240] sm:$0xff]
        %v561 = vld [vmem:[#allocation2 + $0x248] sm:$0xff]
        %v562 = vld [vmem:[#allocation2 + $0x250] sm:$0xff]
        %v563 = vld [vmem:[#allocation2 + $0x258] sm:$0xff]
        %v564 = vld [vmem:[#allocation2 + $0x260] sm:$0xff]
        %v565 = vld [vmem:[#allocation2 + $0x268] sm:$0xff]
        %v566 = vld [vmem:[#allocation2 + $0x270] sm:$0xff]
        %v567 = vld [vmem:[#allocation2 + $0x278] sm:$0xff]
        %v568 = vld [vmem:[#allocation2 + $0x280] sm:$0xff]
        %v569 = vld [vmem:[#allocation2 + $0x288] sm:$0xff]
        %v570 = vld [vmem:[#allocation2 + $0x290] sm:$0xff]
        %v571 = vld [vmem:[#allocation2 + $0x298] sm:$0xff]
        %v572 = vpack.c.bf16 %v557, %v556
        %v573 = vpack.c.bf16 %v559, %v558
        %v574 = vpack.c.bf16 %v561, %v560
        %v575 = vpack.c.bf16 %v563, %v562
        %v576 = vpack.c.bf16 %v565, %v564
        %v577 = vpack.c.bf16 %v567, %v566
        %v578 = vpack.c.bf16 %v569, %v568
        %v579 = vpack.c.bf16 %v571, %v570
        %v580 = vld [vmem:[#allocation2 + $0x2a0] sm:$0x1]
        %v581 = vpack.c.bf16 %v553, %v552
        %v582 = vpack.c.bf16 %v555, %v554
        %v583 = vlaneseq
        %v584 = vshrl.u32 %v583, 7
        %v585 = vsub.s32 0, %v584
        %v586 = vrot.slane %v580, %v585
        %587 = vmatprep.subr.bf16.mxu0 0
        %588 = vmatpush1.bf16.msra.mxu0 %v572
        %589 = vmatprep.subr.bf16.mxu0 0
        %590 = vmatpush1.bf16.msra.mxu0 %v573
        %591 = vmatprep.subr.bf16.mxu0 0
        %592 = vmatpush1.bf16.msra.mxu0 %v574
        %593 = vmatprep.subr.bf16.mxu0 0
        %594 = vmatpush1.bf16.msra.mxu0 %v575
        %595 = vmatprep.subr.bf16.mxu0 0
        %596 = vmatpush1.bf16.msra.mxu0 %v576
        %597 = vmatprep.subr.bf16.mxu0 0
        %598 = vmatpush1.bf16.msra.mxu0 %v577
        %599 = vmatprep.subr.bf16.mxu0 0
        %600 = vmatpush1.bf16.msra.mxu0 %v578
        %601 = vmatprep.subr.bf16.mxu0 0
        %602 = vmatpush1.bf16.msra.mxu0 %v579
        %603 = vmatprep.subr.bf16.mxu0 0
        %604 = vmatpush1.bf16.msra.mxu0 0
        %605 = vmatprep.subr.bf16.mxu0 0
        %606 = vmatpush1.bf16.msra.mxu0 0
        %607 = vmatprep.subr.bf16.mxu0 0
        %608 = vmatpush1.bf16.msra.mxu0 0
        %609 = vmatprep.subr.bf16.mxu0 0
        %610 = vmatpush1.bf16.msra.mxu0 0
        %611 = vmatprep.subr.bf16.mxu0 0
        %612 = vmatpush1.bf16.msra.mxu0 0
        %613 = vmatprep.subr.bf16.mxu0 0
        %614 = vmatpush1.bf16.msra.mxu0 0
        %615 = vmatprep.subr.bf16.mxu0 0
        %616 = vmatpush1.bf16.msra.mxu0 0
        %617 = vmatprep.subr.bf16.mxu0 0
        %618 = vmatpush1.bf16.msra.mxu0 0
        %619 = vmatprep.mubr.bf16.mxu0 0
        %620 = vmatmul.mubr.bf16.gmra.mrb[0].mxu0 %v581
        %v621 = vpop.f32.mrb[0].mxu0
        %v622 = vadd.f32 %v586, %v621
        %v623 = vpop.f32.mrb[0].mxu0
        %v624 = vpop.f32.mrb[0].mxu0
        %v625 = vadd.f32 %v586, %v624
        %v626 = vpop.f32.mrb[0].mxu0
        %627 = vmatprep.mubr.bf16.mxu0 0
        %628 = vmatmul.mubr.bf16.gmra.mrb[0].mxu0 %v582
        %v629 = vpop.f32.mrb[0].mxu0
        %v630 = vadd.f32 %v586, %v629
        %v631 = vpop.f32.mrb[0].mxu0
        %v632 = vpop.f32.mrb[0].mxu0
        %v633 = vadd.f32 %v586, %v632
        %v634 = vpop.f32.mrb[0].mxu0
        %635 = vdwg.mxu0
        %vm636 = vcmask 7168
        %637 = vst.msk [vmem:[%s160] sm:$0xff] %vm636, %v622
        %638 = vst.msk [vmem:[%s160 + $0x8] sm:$0xff] %vm636, %v625
        %639 = vst.msk [vmem:[%s160 + $0x10] sm:$0xff] %vm636, %v630
        %640 = vst.msk [vmem:[%s160 + $0x18] sm:$0xff] %vm636, %v633
        %s641 = smul.u32 4, %s14
        %p642 = scmp.lt.s32.totalorder %s641, 15
        %s643 = scalar_select %p642, %s641, 15
        %s644 = smul.addr %s643, 8
        %s645 = scalar_lea.vmem %s2, %s644
        // Predicated region
        $region33: #{tpu_custom_call.1} parent=27 // pred_check
          %p646 = pneg %p79
        $region34: #{tpu_custom_call.1} parent=27 // pred_check_branch
          %648 = sbr.rel (%p646) target = $region36
        $region35: #{tpu_custom_call.1} parent=27 // pred_region
          %s649 = smul.u32 4, %s14
        $region36: #{tpu_custom_call.1} parent=27 // pred_fallthru
          _
      $region28: #{tpu_custom_call.1} parent=5 // pred_fallthru
        _
      %p650 = scmp.le.s32.totalorder 2, %s9
      // Predicated region
      $region37: #{tpu_custom_call.1} parent=5 // pred_check
        %p651 = pneg %p650
      $region38: #{tpu_custom_call.1} parent=5 // pred_check_branch
        %653 = sbr.rel (%p651) target = $region40
      $region39: #{tpu_custom_call.1} parent=5 // pred_region
        %s654 = ssub.s32 %s9, 2
        // Predicated region
        $region41: #{tpu_custom_call.1} parent=39 // pred_check
          %p655 = pneg %p85
        $region42: #{tpu_custom_call.1} parent=39 // pred_check_branch
          %657 = sbr.rel (%p655) target = $region44
        $region43: #{tpu_custom_call.1} parent=39 // pred_region
          %s658 = smul.u32 4, %s15
          %p659 = scmp.lt.s32.totalorder %s658, 15
          %s660 = scalar_select %p659, %s658, 15
          %s661 = smul.addr %s660, 8
          %s662 = scalar_lea.vmem %s2, %s661
        $region44: #{tpu_custom_call.1} parent=39 // pred_fallthru
          _
      $region40: #{tpu_custom_call.1} parent=5 // pred_fallthru
        _
    $region6: #{tpu_custom_call.1} parent=1 // loop_footer
      %s13 = sadd.s32 1, %s9
    $region7: #{tpu_custom_call.1} parent=1 // loop_footer_branch
      %8 = sbr.rel target = $region3
    $region8: #{tpu_custom_call.1} parent=1 // loop_exit
      _
    %663 = vsyncpa [#allocation3], 1
    %s664 = scalar_lea.sflag [#allocation3], 1
    %665 = vsyncpa %s664, 1

</llo_original>
